<compile_context>
chip_gen: v7x
topology: tpu7x:2x2x1
jax: 0.10.0
libtpu: 0.0.40
codegen_flags: <defaults>
</compile_context>

<pallas_src>
import functools
import math

import jax
import jax.numpy as jnp
import numpy as np
from jax.experimental import pallas as pl
from jax.experimental.pallas import tpu as pltpu


# --------------------------- kernel A1: qkv + RoPE ----------------------------


def qkv_rope_kernel(
    x_ref,      # (1, ts, D)
    anorm_ref,  # (1, D)
    cos_ref,    # (ts, hd)   rotate_half layout: [cos(freqs), cos(freqs)]
    sin_ref,    # (ts, hd)
    wq_ref,     # (D, blk_w)     columns permuted to rotate_half layout, pre-scaled
    wk_ref,     # (D, blk_w_kv)  columns permuted to rotate_half layout
    wv_ref,     # (D, blk_w_kv)
    q_ref,      # (1, ts, blk_w)
    k_ref,      # (1, ts, blk_w_kv)
    v_ref,      # (1, ts, blk_w_kv)
    *,
    hd,
    hpb,
    hpb_kv,
    rms_eps,
):
    # attention_norm recomputed per (tile, head-block): negligible VPU work,
    # removes the (S,D) hoisted scratch.
    x = x_ref[0]
    ms = jnp.mean(x * x, axis=-1, keepdims=True)
    xn = (x * jax.lax.rsqrt(ms + rms_eps)) * anorm_ref[0]

    q = jnp.dot(xn, wq_ref[...], preferred_element_type=jnp.float32)
    k = jnp.dot(xn, wk_ref[...], preferred_element_type=jnp.float32)
    v = jnp.dot(xn, wv_ref[...], preferred_element_type=jnp.float32)

    cos = cos_ref[...]
    sin = sin_ref[...]
    hd2 = hd // 2

    def rope(t, n_heads):
        # rotate_half per head: swz = [-t2, t1]; out = t*cos + swz*sin
        cols = []
        for h in range(n_heads):
            th = t[:, h * hd:(h + 1) * hd]
            swz = jnp.concatenate([-th[:, hd2:], th[:, :hd2]], axis=-1)
            cols.append(th * cos + swz * sin)
        return cols[0] if n_heads == 1 else jnp.concatenate(cols, axis=-1)

    q_ref[0] = rope(q, hpb)
    k_ref[0] = rope(k, hpb_kv)
    v_ref[0] = v


# ------------------------ kernel A2: flash attention --------------------------


def flash_attn_kernel(
    x_ref,      # (1, tq, D)        residual input
    q_ref,      # (1, tq, blk_w)    pre-scaled by 1/sqrt(hd)
    k_ref,      # (1, tk, blk_w_kv)
    v_ref,      # (1, tk, blk_w_kv)
    wo_ref,     # (blk_w, D)
    h_ref,      # (1, tq, D)        output: x + attention
    m_scr,      # VMEM (tq, hpb)    running max per head
    l_scr,      # VMEM (tq, hpb)    running denom per head
    o_scr,      # VMEM (tq, blk_w)  unnormalized per-head outputs
    acc_scr,    # VMEM (tq, D)      attention accumulator over head blocks
    *,
    hpb,
    hd,
    n_rep,
    tq,
    tk,
):
    qi = pl.program_id(1)
    g = pl.program_id(2)
    ki = pl.program_id(3)
    n_g = pl.num_programs(2)
    n_k = pl.num_programs(3)

    @pl.when(jnp.logical_and(g == 0, ki == 0))
    def _():
        acc_scr[...] = jnp.zeros_like(acc_scr)

    @pl.when(ki == 0)
    def _():
        m_scr[...] = jnp.full_like(m_scr, -jnp.inf)
        l_scr[...] = jnp.zeros_like(l_scr)
        o_scr[...] = jnp.zeros_like(o_scr)

    # kv tiles strictly above the causal diagonal contribute nothing: skip.
    @pl.when(ki * tk < (qi + 1) * tq)
    def _():
        q = q_ref[0]
        k = k_ref[0]
        v = v_ref[0]
        rows = qi * tq + jax.lax.broadcasted_iota(jnp.int32, (tq, tk), 0)
        cols = ki * tk + jax.lax.broadcasted_iota(jnp.int32, (tq, tk), 1)
        causal = rows >= cols
        neg = jnp.float32(-1e30)   # finite: avoids exp(-inf - -inf) NaNs
        # static head loop: with flash tiling the per-head live state is only
        # (tq, tk), so the unrolled loop stays within vreg/VMEM budget.
        for h in range(hpb):
            qh = q[:, h * hd:(h + 1) * hd]
            kv_h = h // n_rep      # GQA repeat_interleave mapping
            kh = k[:, kv_h * hd:(kv_h + 1) * hd]
            vh = v[:, kv_h * hd:(kv_h + 1) * hd]
            s = jax.lax.dot_general(qh, kh, (((1,), (1,)), ((), ())),
                                    preferred_element_type=jnp.float32)
            s = jnp.where(causal, s, neg)
            m_prev = m_scr[:, h:h + 1]
            m_new = jnp.maximum(m_prev, jnp.max(s, axis=-1, keepdims=True))
            alpha = jnp.exp(m_prev - m_new)
            p = jnp.exp(s - m_new)
            l_scr[:, h:h + 1] = (alpha * l_scr[:, h:h + 1]
                                 + jnp.sum(p, axis=-1, keepdims=True))
            o_scr[:, h * hd:(h + 1) * hd] = (
                alpha * o_scr[:, h * hd:(h + 1) * hd]
                + jnp.dot(p, vh, preferred_element_type=jnp.float32))
            m_scr[:, h:h + 1] = m_new

    @pl.when(ki == n_k - 1)
    def _():
        # EUP approx reciprocal + one Newton step (f32-accurate).
        l = l_scr[...]
        inv = pl.reciprocal(l, approx=True)
        inv = inv * (2.0 - l * inv)
        o = o_scr[...]
        cols = [o[:, h * hd:(h + 1) * hd] * inv[:, h:h + 1] for h in range(hpb)]
        o_n = cols[0] if hpb == 1 else jnp.concatenate(cols, axis=-1)
        acc_scr[...] += jnp.dot(o_n, wo_ref[...],
                                preferred_element_type=jnp.float32)

    @pl.when(jnp.logical_and(g == n_g - 1, ki == n_k - 1))
    def _():
        h_ref[0] = x_ref[0] + acc_scr[...]


# ------------------------------ kernel B: FFN ---------------------------------


def ffn_kernel(h_ref, fnorm_ref, w1_ref, w3_ref, w2_ref, out_ref,
               hn_scr, acc_scr, *, rms_eps):
    kb = pl.program_id(2)

    @pl.when(kb == 0)
    def _():
        h = h_ref[0]
        ms = jnp.mean(h * h, axis=-1, keepdims=True)
        hn_scr[...] = (h * jax.lax.rsqrt(ms + rms_eps)) * fnorm_ref[0]
        acc_scr[...] = jnp.zeros_like(acc_scr)

    hn = hn_scr[...]
    a = jnp.dot(hn, w1_ref[...], preferred_element_type=jnp.float32)
    b = jnp.dot(hn, w3_ref[...], preferred_element_type=jnp.float32)
    acc_scr[...] += jnp.dot(a * jax.nn.sigmoid(a) * b, w2_ref[...],
                            preferred_element_type=jnp.float32)

    @pl.when(kb == pl.num_programs(2) - 1)
    def _():
        out_ref[0] = h_ref[0] + acc_scr[...]


# -------------------------- kernel C: PLE epilogue ----------------------------


def ple_kernel(h_ref, ple_ref, gate_ref, proj_ref, lng_ref, lnb_ref, out_ref,
               *, ln_eps):
    h = h_ref[0]
    g = jax.nn.gelu(
        jnp.dot(h, gate_ref[...], preferred_element_type=jnp.float32),
        approximate=False)
    proj = jnp.dot(g * ple_ref[0], proj_ref[...],
                   preferred_element_type=jnp.float32)
    mu = jnp.mean(proj, axis=-1, keepdims=True)
    var = jnp.mean((proj - mu) ** 2, axis=-1, keepdims=True)
    normed = (proj - mu) * jax.lax.rsqrt(var + ln_eps)
    out_ref[0] = h + normed * lng_ref[0] + lnb_ref[0]


# ------------------------------ tiling helpers --------------------------------


def _vmem_limit_bytes():
    cap = 64 * 1024 * 1024
    try:
        info = pltpu.get_tpu_info()
        cap = int(getattr(info, "vmem_capacity_bytes", cap))
    except Exception:
        pass
    # 8 MiB headroom for the compiler; never above 100 MiB (v5e/v6e guidance).
    return max(32 * 1024 * 1024, min(cap - 8 * 1024 * 1024, 100 * 1024 * 1024))


def _pick_seq_tile(S, cap=256):
    best = None
    for t in range(8, min(S, cap) + 1, 8):
        if S % t == 0:
            best = t
    return best if best is not None else S


def _pick_heads_per_block(H, Hkv, hd, target=256):
    """Multiple of n_rep dividing H with lane-aligned q/kv widths; prefer <= target."""
    n_rep = H // Hkv
    valid = []
    for cand in range(n_rep, H + 1, n_rep):
        if H % cand:
            continue
        qw, kw = cand * hd, (cand // n_rep) * hd
        if ((qw % 128 == 0) or cand == H) and ((kw % 128 == 0) or cand == H):
            valid.append(cand)
    under = [c for c in valid if c * hd <= target]
    if under:
        return max(under)
    return min(valid)   # smallest lane-aligned block above target (bounds VMEM)


def _pick_hid_block(Hid, cap=512):
    best = None
    for c in range(128, min(Hid, cap) + 1, 128):
        if Hid % c == 0:
            best = c
    return best if best is not None else Hid


# ----------------------------------- wrapper -----------------------------------


def block_forward(x, per_layer_emb, cos_f, sin_f, params,
                  rms_eps=1e-6, ln_eps=1e-5):
    B, S, D = x.shape
    H, _, hd = params["wq"].shape
    Hkv = params["wk"].shape[0]
    n_rep = H // Hkv
    Hid = params["w1"].shape[1]
    P = per_layer_emb.shape[-1]
    f32 = jnp.float32
    vmem_limit = _vmem_limit_bytes()

    # ---- tiling choices ----
    ts = _pick_seq_tile(S)
    ST = S // ts
    hpb = _pick_heads_per_block(H, Hkv, hd)
    hpb_kv = hpb // n_rep
    blk_w = hpb * hd
    blk_w_kv = hpb_kv * hd
    HB = H // hpb
    hid_blk = _pick_hid_block(Hid)
    KB = Hid // hid_blk

    # ---- host-side weight prep ----
    # rotate_half column permutation per head (evens then odds). q.k scores are
    # invariant to this consistent permutation; v / wo stay in original layout.
    perm = np.concatenate([np.arange(0, hd, 2), np.arange(1, hd, 2)])
    scale = 1.0 / math.sqrt(hd)
    wq_flat = (jnp.transpose(params["wq"][:, :, perm], (1, 0, 2))
               .reshape(D, H * hd) * scale)
    wk_flat = jnp.transpose(params["wk"][:, :, perm], (1, 0, 2)).reshape(D, Hkv * hd)
    wv_flat = jnp.transpose(params["wv"], (1, 0, 2)).reshape(D, Hkv * hd)
    wo_flat = params["wo"].reshape(H * hd, D)

    cf = cos_f[:, 0::2]                             # (S, hd//2)
    sf = sin_f[:, 0::2]
    cos_rh = jnp.concatenate([cf, cf], axis=-1)     # (S, hd) rotate_half layout
    sin_rh = jnp.concatenate([sf, sf], axis=-1)

    # ------------------ A1: qkv + RoPE ------------------
    qkv_kern = functools.partial(qkv_rope_kernel, hd=hd, hpb=hpb, hpb_kv=hpb_kv,
                                 rms_eps=rms_eps)
    q, k, v = pl.pallas_call(
        qkv_kern,
        out_shape=(jax.ShapeDtypeStruct((B, S, H * hd), f32),
                   jax.ShapeDtypeStruct((B, S, Hkv * hd), f32),
                   jax.ShapeDtypeStruct((B, S, Hkv * hd), f32)),
        grid_spec=pltpu.PrefetchScalarGridSpec(
            num_scalar_prefetch=0,
            grid=(B, ST, HB),
            in_specs=[
                pl.BlockSpec((1, ts, D), lambda b, s, g: (b, s, 0)),
                pl.BlockSpec((1, D), lambda b, s, g: (0, 0)),
                pl.BlockSpec((ts, hd), lambda b, s, g: (s, 0)),
                pl.BlockSpec((ts, hd), lambda b, s, g: (s, 0)),
                pl.BlockSpec((D, blk_w), lambda b, s, g: (0, g)),
                pl.BlockSpec((D, blk_w_kv), lambda b, s, g: (0, g)),
                pl.BlockSpec((D, blk_w_kv), lambda b, s, g: (0, g)),
            ],
            out_specs=(
                pl.BlockSpec((1, ts, blk_w), lambda b, s, g: (b, s, g)),
                pl.BlockSpec((1, ts, blk_w_kv), lambda b, s, g: (b, s, g)),
                pl.BlockSpec((1, ts, blk_w_kv), lambda b, s, g: (b, s, g)),
            ),
        ),
        compiler_params=pltpu.CompilerParams(
            dimension_semantics=("parallel", "parallel", "arbitrary"),
            vmem_limit_bytes=vmem_limit),
    )(x, params["attn_norm"].reshape(1, D), cos_rh, sin_rh,
      wq_flat, wk_flat, wv_flat)

    # ------------------ A2: flash attention ------------------
    attn_kern = functools.partial(flash_attn_kernel, hpb=hpb, hd=hd,
                                  n_rep=n_rep, tq=ts, tk=ts)
    h = pl.pallas_call(
        attn_kern,
        out_shape=jax.ShapeDtypeStruct((B, S, D), f32),
        grid_spec=pltpu.PrefetchScalarGridSpec(
            num_scalar_prefetch=0,
            grid=(B, ST, HB, ST),   # (batch, q tiles, head blocks, kv tiles)
            in_specs=[
                pl.BlockSpec((1, ts, D), lambda b, qi, g, ki: (b, qi, 0)),
                pl.BlockSpec((1, ts, blk_w), lambda b, qi, g, ki: (b, qi, g)),
                pl.BlockSpec((1, ts, blk_w_kv), lambda b, qi, g, ki: (b, ki, g)),
                pl.BlockSpec((1, ts, blk_w_kv), lambda b, qi, g, ki: (b, ki, g)),
                pl.BlockSpec((blk_w, D), lambda b, qi, g, ki: (g, 0)),
            ],
            out_specs=pl.BlockSpec((1, ts, D), lambda b, qi, g, ki: (b, qi, 0)),
            scratch_shapes=[
                pltpu.VMEM((ts, hpb), f32),     # running max per head
                pltpu.VMEM((ts, hpb), f32),     # running denom per head
                pltpu.VMEM((ts, blk_w), f32),   # unnormalized head outputs
                pltpu.VMEM((ts, D), f32),       # attention accumulator
            ],
        ),
        compiler_params=pltpu.CompilerParams(
            dimension_semantics=("parallel", "parallel", "arbitrary", "arbitrary"),
            vmem_limit_bytes=vmem_limit),
    )(x, q, k, v, wo_flat)

    # ------------------ B: SwiGLU FFN ------------------
    ffn_kern = functools.partial(ffn_kernel, rms_eps=rms_eps)
    h2 = pl.pallas_call(
        ffn_kern,
        out_shape=jax.ShapeDtypeStruct((B, S, D), f32),
        grid_spec=pltpu.PrefetchScalarGridSpec(
            num_scalar_prefetch=0,
            grid=(B, ST, KB),
            in_specs=[
                pl.BlockSpec((1, ts, D), lambda b, s, kb: (b, s, 0)),
                pl.BlockSpec((1, D), lambda b, s, kb: (0, 0)),
                pl.BlockSpec((D, hid_blk), lambda b, s, kb: (0, kb)),
                pl.BlockSpec((D, hid_blk), lambda b, s, kb: (0, kb)),
                pl.BlockSpec((hid_blk, D), lambda b, s, kb: (kb, 0)),
            ],
            out_specs=pl.BlockSpec((1, ts, D), lambda b, s, kb: (b, s, 0)),
            scratch_shapes=[
                pltpu.VMEM((ts, D), f32),   # ffn_norm(h) for this tile
                pltpu.VMEM((ts, D), f32),   # FFN accumulator
            ],
        ),
        compiler_params=pltpu.CompilerParams(
            dimension_semantics=("parallel", "parallel", "arbitrary"),
            vmem_limit_bytes=vmem_limit),
    )(h, params["ffn_norm"].reshape(1, D), params["w1"], params["w3"],
      params["w2"])

    # ------------------ C: PLE epilogue ------------------
    Pp = ((P + 127) // 128) * 128      # lane-align the PLE dim (zero padding)
    pad = Pp - P
    ple_p = jnp.pad(per_layer_emb, ((0, 0), (0, 0), (0, pad)))
    gate_p = jnp.pad(params["gate"], ((0, 0), (0, pad)))
    proj_p = jnp.pad(params["proj"], ((0, pad), (0, 0)))

    ple_kern = functools.partial(ple_kernel, ln_eps=ln_eps)
    out = pl.pallas_call(
        ple_kern,
        out_shape=jax.ShapeDtypeStruct((B, S, D), f32),
        grid_spec=pltpu.PrefetchScalarGridSpec(
            num_scalar_prefetch=0,
            grid=(B, ST),
            in_specs=[
                pl.BlockSpec((1, ts, D), lambda b, s: (b, s, 0)),
                pl.BlockSpec((1, ts, Pp), lambda b, s: (b, s, 0)),
                pl.BlockSpec((D, Pp), lambda b, s: (0, 0)),
                pl.BlockSpec((Pp, D), lambda b, s: (0, 0)),
                pl.BlockSpec((1, D), lambda b, s: (0, 0)),
                pl.BlockSpec((1, D), lambda b, s: (0, 0)),
            ],
            out_specs=pl.BlockSpec((1, ts, D), lambda b, s: (b, s, 0)),
        ),
        compiler_params=pltpu.CompilerParams(
            dimension_semantics=("parallel", "parallel"),
            vmem_limit_bytes=vmem_limit),
    )(h2, ple_p, gate_p, proj_p,
      params["ln_g"].reshape(1, D), params["ln_b"].reshape(1, D))

    return out


# ------------------------- pure-JAX reference --------------------------------


def block_reference(x, per_layer_emb, cos_f, sin_f, rotP, params,
                    rms_eps=1e-6, ln_eps=1e-5):
    H, _, hd = params["wq"].shape
    Hkv = params["wk"].shape[0]
    n_rep = H // Hkv
    S = x.shape[1]

    def rms(v, w):
        return w * (v * jax.lax.rsqrt(jnp.mean(v * v, -1, keepdims=True) + rms_eps))

    xn = rms(x, params["attn_norm"])
    q = jnp.einsum("bsd,hde->bshe", xn, params["wq"])
    k = jnp.einsum("bsd,hde->bshe", xn, params["wk"])
    v = jnp.einsum("bsd,hde->bshe", xn, params["wv"])
    c = cos_f[None, :, None, :]
    s = sin_f[None, :, None, :]
    q = q * c + jnp.einsum("bshe,ef->bshf", q, rotP) * s
    k = k * c + jnp.einsum("bshe,ef->bshf", k, rotP) * s
    k = jnp.repeat(k, n_rep, axis=2)  # repeat_kv (repeat_interleave on heads)
    v = jnp.repeat(v, n_rep, axis=2)
    scores = jnp.einsum("bqhe,bkhe->bhqk", q, k) / math.sqrt(hd)
    mask = jnp.tril(jnp.ones((S, S), bool))
    scores = jnp.where(mask[None, None], scores, -jnp.inf)
    probs = jax.nn.softmax(scores, axis=-1)
    o = jnp.einsum("bhqk,bkhe->bqhe", probs, v)
    attn = jnp.einsum("bqhe,hed->bqd", o, params["wo"])
    h = x + attn
    hn = rms(h, params["ffn_norm"])
    a = hn @ params["w1"]
    g3 = hn @ params["w3"]
    h = h + (jax.nn.silu(a) * g3) @ params["w2"]
    gate = jax.nn.gelu(h @ params["gate"], approximate=False)
    proj = (gate * per_layer_emb) @ params["proj"]
    mu = proj.mean(-1, keepdims=True)
    var = ((proj - mu) ** 2).mean(-1, keepdims=True)
    ple_out = (proj - mu) * jax.lax.rsqrt(var + ln_eps) * params["ln_g"] + params["ln_b"]
    return h + ple_out


# ------------------------------- main -----------------------------------------


if __name__ == "__main__":
    # small config consistent with the module
    B, S, D = 2, 8, 32
    H, Hkv = 4, 2
    hd = D // H
    # FeedForward hidden_dim rule: 4*D -> 2/3 -> round up to multiple_of=32
    Hid = 32 * ((int(2 * 4 * D / 3) + 31) // 32)   # 96
    PLE = 16

    key = jax.random.PRNGKey(0)
    ks = jax.random.split(key, 20)
    nrm = lambda k, shp, s=0.05: (jax.random.normal(k, shp, jnp.float32) * s)

    params = {
        "attn_norm": 1.0 + 0.1 * jax.random.normal(ks[0], (D,), jnp.float32),
        "wq": nrm(ks[1], (H, D, hd)),
        "wk": nrm(ks[2], (Hkv, D, hd)),
        "wv": nrm(ks[3], (Hkv, D, hd)),
        "wo": nrm(ks[4], (H, hd, D)),
        "ffn_norm": 1.0 + 0.1 * jax.random.normal(ks[5], (D,), jnp.float32),
        "w1": nrm(ks[6], (D, Hid)),
        "w2": nrm(ks[7], (Hid, D)),
        "w3": nrm(ks[8], (D, Hid)),
        "gate": nrm(ks[9], (D, PLE)),
        "proj": nrm(ks[10], (PLE, D)),
        "ln_g": 1.0 + 0.1 * jax.random.normal(ks[11], (D,), jnp.float32),
        "ln_b": 0.02 * jax.random.normal(ks[12], (D,), jnp.float32),
    }

    x = jax.random.normal(ks[13], (B, S, D), jnp.float32)
    per_layer_emb = jax.random.normal(ks[14], (B, S, PLE), jnp.float32)

    # rotary embedding (pos_cis) as interleaved cos/sin + pair-rotation matrix
    inv_freq = 1.0 / (10000.0 ** (jnp.arange(0, hd, 2, dtype=jnp.float32) / hd))
    t = jnp.arange(S, dtype=jnp.float32)
    freqs = jnp.outer(t, inv_freq)                  # (S, hd//2)
    cos_f = jnp.repeat(jnp.cos(freqs), 2, axis=-1)  # (S, hd)
    sin_f = jnp.repeat(jnp.sin(freqs), 2, axis=-1)  # (S, hd)
    rotP_np = np.zeros((hd, hd), np.float32)
    for i in range(hd // 2):
        rotP_np[2 * i + 1, 2 * i] = -1.0
        rotP_np[2 * i, 2 * i + 1] = 1.0
    rotP = jnp.asarray(rotP_np)

    out = block_forward(x, per_layer_emb, cos_f, sin_f, params)
    out = jax.block_until_ready(out)

    ref = block_reference(x, per_layer_emb, cos_f, sin_f, rotP, params)
    assert out.shape == (B, S, D)
    assert bool(jnp.allclose(out, ref, rtol=5e-4, atol=5e-4)), "mismatch vs reference"

    # TODO(synk): training-mode paths (dropout, MoE aux loss / expert dispatch) and
    # KV-cache concatenation are not exercised (eval, use_moe=False, use_cache=False).
    print("KERNEL_OK")
</pallas_src>

<mosaic_0001>
module attributes {stable_mosaic.version = 11 : i64} {
  func.func @qkv_rope_kernel(%arg0: i32, %arg1: i32, %arg2: i32, %arg3: memref<1x8x32xf32, #tpu.memory_space<vmem>>, %arg4: memref<1x32xf32, #tpu.memory_space<vmem>>, %arg5: memref<8x8xf32, #tpu.memory_space<vmem>>, %arg6: memref<8x8xf32, #tpu.memory_space<vmem>>, %arg7: memref<32x32xf32, #tpu.memory_space<vmem>>, %arg8: memref<32x16xf32, #tpu.memory_space<vmem>>, %arg9: memref<32x16xf32, #tpu.memory_space<vmem>>, %arg10: memref<1x8x32xf32, #tpu.memory_space<vmem>>, %arg11: memref<1x8x16xf32, #tpu.memory_space<vmem>>, %arg12: memref<1x8x16xf32, #tpu.memory_space<vmem>>) attributes {dimension_semantics = [#tpu.dimension_semantics<parallel>, #tpu.dimension_semantics<parallel>, #tpu.dimension_semantics<arbitrary>], iteration_bounds = array<i64: 2, 1, 1>, scalar_prefetch = 0 : i64, scratch_operands = 0 : i64, tpu.core_type = #tpu.core_type<tc>, window_params = [{transform_indices = @transform_0, window_bounds = array<i64: 1, 8, 32>}, {pipeline_mode = #tpu.pipeline_mode<synchronous>, transform_indices = @transform_1, window_bounds = array<i64: 1, 32>}, {transform_indices = @transform_2, window_bounds = array<i64: 8, 8>}, {transform_indices = @transform_3, window_bounds = array<i64: 8, 8>}, {transform_indices = @transform_4, window_bounds = array<i64: 32, 32>}, {transform_indices = @transform_5, window_bounds = array<i64: 32, 16>}, {transform_indices = @transform_6, window_bounds = array<i64: 32, 16>}, {transform_indices = @transform_7, window_bounds = array<i64: 1, 8, 32>}, {transform_indices = @transform_8, window_bounds = array<i64: 1, 8, 16>}, {transform_indices = @transform_9, window_bounds = array<i64: 1, 8, 16>}]} {
    %c0 = arith.constant 0 : index
    %c0_0 = arith.constant 0 : index
    %c0_1 = arith.constant 0 : index
    %0 = vector.load %arg3[%c0, %c0_0, %c0_1] : memref<1x8x32xf32, #tpu.memory_space<vmem>>, vector<1x8x32xf32>
    %1 = vector.shape_cast %0 : vector<1x8x32xf32> to vector<8x32xf32>
    %2 = arith.mulf %1, %1 : vector<8x32xf32>
    %cst = arith.constant dense<0.000000e+00> : vector<8xf32>
    %3 = vector.multi_reduction <add>, %2, %cst [1] : vector<8x32xf32> to vector<8xf32>
    %4 = vector.shape_cast %3 : vector<8xf32> to vector<8x1xf32>
    %cst_2 = arith.constant 3.200000e+01 : f32
    %5 = vector.broadcast %cst_2 : f32 to vector<8x1xf32>
    %6 = arith.divf %4, %5 : vector<8x1xf32>
    %cst_3 = arith.constant 9.99999997E-7 : f32
    %7 = vector.broadcast %cst_3 : f32 to vector<8x1xf32>
    %8 = arith.addf %6, %7 : vector<8x1xf32>
    %9 = math.rsqrt %8 : vector<8x1xf32>
    %10 = vector.broadcast %9 : vector<8x1xf32> to vector<8x32xf32>
    %11 = arith.mulf %1, %10 : vector<8x32xf32>
    %c0_4 = arith.constant 0 : index
    %c0_5 = arith.constant 0 : index
    %12 = vector.load %arg4[%c0_4, %c0_5] : memref<1x32xf32, #tpu.memory_space<vmem>>, vector<1x32xf32>
    %13 = vector.shape_cast %12 : vector<1x32xf32> to vector<32xf32>
    %14 = vector.shape_cast %13 : vector<32xf32> to vector<1x32xf32>
    %15 = vector.broadcast %14 : vector<1x32xf32> to vector<8x32xf32>
    %16 = arith.mulf %11, %15 : vector<8x32xf32>
    %c0_6 = arith.constant 0 : index
    %c0_7 = arith.constant 0 : index
    %17 = vector.load %arg7[%c0_6, %c0_7] : memref<32x32xf32, #tpu.memory_space<vmem>>, vector<32x32xf32>
    %cst_8 = arith.constant dense<0.000000e+00> : vector<8x32xf32>
    %18 = tpu.matmul %16, %17, %cst_8 {dimension_numbers = #tpu.dot_dimension_numbers<[1], [0], [0], [1], [0, 0, 1, 1], [], []>} : vector<8x32xf32>, vector<32x32xf32>, vector<8x32xf32> -> vector<8x32xf32>
    %c0_9 = arith.constant 0 : index
    %c0_10 = arith.constant 0 : index
    %19 = vector.load %arg8[%c0_9, %c0_10] : memref<32x16xf32, #tpu.memory_space<vmem>>, vector<32x16xf32>
    %cst_11 = arith.constant dense<0.000000e+00> : vector<8x16xf32>
    %20 = tpu.matmul %16, %19, %cst_11 {dimension_numbers = #tpu.dot_dimension_numbers<[1], [0], [0], [1], [0, 0, 1, 1], [], []>} : vector<8x32xf32>, vector<32x16xf32>, vector<8x16xf32> -> vector<8x16xf32>
    %c0_12 = arith.constant 0 : index
    %c0_13 = arith.constant 0 : index
    %21 = vector.load %arg9[%c0_12, %c0_13] : memref<32x16xf32, #tpu.memory_space<vmem>>, vector<32x16xf32>
    %cst_14 = arith.constant dense<0.000000e+00> : vector<8x16xf32>
    %22 = tpu.matmul %16, %21, %cst_14 {dimension_numbers = #tpu.dot_dimension_numbers<[1], [0], [0], [1], [0, 0, 1, 1], [], []>} : vector<8x32xf32>, vector<32x16xf32>, vector<8x16xf32> -> vector<8x16xf32>
    %c0_15 = arith.constant 0 : index
    %c0_16 = arith.constant 0 : index
    %23 = vector.load %arg5[%c0_15, %c0_16] : memref<8x8xf32, #tpu.memory_space<vmem>>, vector<8x8xf32>
    %c0_17 = arith.constant 0 : index
    %c0_18 = arith.constant 0 : index
    %24 = vector.load %arg6[%c0_17, %c0_18] : memref<8x8xf32, #tpu.memory_space<vmem>>, vector<8x8xf32>
    %25 = vector.extract_strided_slice %18 {offsets = [0, 0], sizes = [8, 8], strides = [1, 1]} : vector<8x32xf32> to vector<8x8xf32>
    %26 = vector.extract_strided_slice %25 {offsets = [0, 4], sizes = [8, 4], strides = [1, 1]} : vector<8x8xf32> to vector<8x4xf32>
    %cst_19 = arith.constant 0.000000e+00 : f32
    %27 = vector.broadcast %cst_19 : f32 to vector<8x4xf32>
    %28 = arith.subf %27, %26 : vector<8x4xf32>
    %29 = vector.extract_strided_slice %25 {offsets = [0, 0], sizes = [8, 4], strides = [1, 1]} : vector<8x8xf32> to vector<8x4xf32>
    %30 = tpu.concatenate %28, %29 in 1 : vector<8x4xf32>, vector<8x4xf32> -> vector<8x8xf32>
    %31 = arith.mulf %25, %23 : vector<8x8xf32>
    %32 = arith.mulf %30, %24 : vector<8x8xf32>
    %33 = arith.addf %31, %32 : vector<8x8xf32>
    %34 = vector.extract_strided_slice %18 {offsets = [0, 8], sizes = [8, 8], strides = [1, 1]} : vector<8x32xf32> to vector<8x8xf32>
    %35 = vector.extract_strided_slice %34 {offsets = [0, 4], sizes = [8, 4], strides = [1, 1]} : vector<8x8xf32> to vector<8x4xf32>
    %cst_20 = arith.constant 0.000000e+00 : f32
    %36 = vector.broadcast %cst_20 : f32 to vector<8x4xf32>
    %37 = arith.subf %36, %35 : vector<8x4xf32>
    %38 = vector.extract_strided_slice %34 {offsets = [0, 0], sizes = [8, 4], strides = [1, 1]} : vector<8x8xf32> to vector<8x4xf32>
    %39 = tpu.concatenate %37, %38 in 1 : vector<8x4xf32>, vector<8x4xf32> -> vector<8x8xf32>
    %40 = arith.mulf %34, %23 : vector<8x8xf32>
    %41 = arith.mulf %39, %24 : vector<8x8xf32>
    %42 = arith.addf %40, %41 : vector<8x8xf32>
    %43 = vector.extract_strided_slice %18 {offsets = [0, 16], sizes = [8, 8], strides = [1, 1]} : vector<8x32xf32> to vector<8x8xf32>
    %44 = vector.extract_strided_slice %43 {offsets = [0, 4], sizes = [8, 4], strides = [1, 1]} : vector<8x8xf32> to vector<8x4xf32>
    %cst_21 = arith.constant 0.000000e+00 : f32
    %45 = vector.broadcast %cst_21 : f32 to vector<8x4xf32>
    %46 = arith.subf %45, %44 : vector<8x4xf32>
    %47 = vector.extract_strided_slice %43 {offsets = [0, 0], sizes = [8, 4], strides = [1, 1]} : vector<8x8xf32> to vector<8x4xf32>
    %48 = tpu.concatenate %46, %47 in 1 : vector<8x4xf32>, vector<8x4xf32> -> vector<8x8xf32>
    %49 = arith.mulf %43, %23 : vector<8x8xf32>
    %50 = arith.mulf %48, %24 : vector<8x8xf32>
    %51 = arith.addf %49, %50 : vector<8x8xf32>
    %52 = vector.extract_strided_slice %18 {offsets = [0, 24], sizes = [8, 8], strides = [1, 1]} : vector<8x32xf32> to vector<8x8xf32>
    %53 = vector.extract_strided_slice %52 {offsets = [0, 4], sizes = [8, 4], strides = [1, 1]} : vector<8x8xf32> to vector<8x4xf32>
    %cst_22 = arith.constant 0.000000e+00 : f32
    %54 = vector.broadcast %cst_22 : f32 to vector<8x4xf32>
    %55 = arith.subf %54, %53 : vector<8x4xf32>
    %56 = vector.extract_strided_slice %52 {offsets = [0, 0], sizes = [8, 4], strides = [1, 1]} : vector<8x8xf32> to vector<8x4xf32>
    %57 = tpu.concatenate %55, %56 in 1 : vector<8x4xf32>, vector<8x4xf32> -> vector<8x8xf32>
    %58 = arith.mulf %52, %23 : vector<8x8xf32>
    %59 = arith.mulf %57, %24 : vector<8x8xf32>
    %60 = arith.addf %58, %59 : vector<8x8xf32>
    %61 = tpu.concatenate %33, %42, %51, %60 in 1 : vector<8x8xf32>, vector<8x8xf32>, vector<8x8xf32>, vector<8x8xf32> -> vector<8x32xf32>
    %c0_23 = arith.constant 0 : index
    %c0_24 = arith.constant 0 : index
    %c0_25 = arith.constant 0 : index
    %62 = vector.load %arg10[%c0_23, %c0_24, %c0_25] : memref<1x8x32xf32, #tpu.memory_space<vmem>>, vector<1x8x32xf32>
    %63 = vector.shape_cast %62 : vector<1x8x32xf32> to vector<8x32xf32>
    %64 = vector.shape_cast %61 : vector<8x32xf32> to vector<1x8x32xf32>
    tpu.vector_store %arg10[%c0_23, %c0_24, %c0_25], %64 {strides = array<i32>} : memref<1x8x32xf32, #tpu.memory_space<vmem>>, vector<1x8x32xf32>,
    %65 = vector.extract_strided_slice %20 {offsets = [0, 0], sizes = [8, 8], strides = [1, 1]} : vector<8x16xf32> to vector<8x8xf32>
    %66 = vector.extract_strided_slice %65 {offsets = [0, 4], sizes = [8, 4], strides = [1, 1]} : vector<8x8xf32> to vector<8x4xf32>
    %cst_26 = arith.constant 0.000000e+00 : f32
    %67 = vector.broadcast %cst_26 : f32 to vector<8x4xf32>
    %68 = arith.subf %67, %66 : vector<8x4xf32>
    %69 = vector.extract_strided_slice %65 {offsets = [0, 0], sizes = [8, 4], strides = [1, 1]} : vector<8x8xf32> to vector<8x4xf32>
    %70 = tpu.concatenate %68, %69 in 1 : vector<8x4xf32>, vector<8x4xf32> -> vector<8x8xf32>
    %71 = arith.mulf %65, %23 : vector<8x8xf32>
    %72 = arith.mulf %70, %24 : vector<8x8xf32>
    %73 = arith.addf %71, %72 : vector<8x8xf32>
    %74 = vector.extract_strided_slice %20 {offsets = [0, 8], sizes = [8, 8], strides = [1, 1]} : vector<8x16xf32> to vector<8x8xf32>
    %75 = vector.extract_strided_slice %74 {offsets = [0, 4], sizes = [8, 4], strides = [1, 1]} : vector<8x8xf32> to vector<8x4xf32>
    %cst_27 = arith.constant 0.000000e+00 : f32
    %76 = vector.broadcast %cst_27 : f32 to vector<8x4xf32>
    %77 = arith.subf %76, %75 : vector<8x4xf32>
    %78 = vector.extract_strided_slice %74 {offsets = [0, 0], sizes = [8, 4], strides = [1, 1]} : vector<8x8xf32> to vector<8x4xf32>
    %79 = tpu.concatenate %77, %78 in 1 : vector<8x4xf32>, vector<8x4xf32> -> vector<8x8xf32>
    %80 = arith.mulf %74, %23 : vector<8x8xf32>
    %81 = arith.mulf %79, %24 : vector<8x8xf32>
    %82 = arith.addf %80, %81 : vector<8x8xf32>
    %83 = tpu.concatenate %73, %82 in 1 : vector<8x8xf32>, vector<8x8xf32> -> vector<8x16xf32>
    %c0_28 = arith.constant 0 : index
    %c0_29 = arith.constant 0 : index
    %c0_30 = arith.constant 0 : index
    %84 = vector.load %arg11[%c0_28, %c0_29, %c0_30] : memref<1x8x16xf32, #tpu.memory_space<vmem>>, vector<1x8x16xf32>
    %85 = vector.shape_cast %84 : vector<1x8x16xf32> to vector<8x16xf32>
    %86 = vector.shape_cast %83 : vector<8x16xf32> to vector<1x8x16xf32>
    tpu.vector_store %arg11[%c0_28, %c0_29, %c0_30], %86 {strides = array<i32>} : memref<1x8x16xf32, #tpu.memory_space<vmem>>, vector<1x8x16xf32>,
    %c0_31 = arith.constant 0 : index
    %c0_32 = arith.constant 0 : index
    %c0_33 = arith.constant 0 : index
    %87 = vector.load %arg12[%c0_31, %c0_32, %c0_33] : memref<1x8x16xf32, #tpu.memory_space<vmem>>, vector<1x8x16xf32>
    %88 = vector.shape_cast %87 : vector<1x8x16xf32> to vector<8x16xf32>
    %89 = vector.shape_cast %22 : vector<8x16xf32> to vector<1x8x16xf32>
    tpu.vector_store %arg12[%c0_31, %c0_32, %c0_33], %89 {strides = array<i32>} : memref<1x8x16xf32, #tpu.memory_space<vmem>>, vector<1x8x16xf32>,
    return
  }
  func.func @transform_0(%arg0: i32, %arg1: i32, %arg2: i32) -> (i32, i32, i32) {
    %c0_i32 = arith.constant 0 : i32
    %c0_i32_0 = arith.constant 0 : i32
    return %arg0, %arg1, %c0_i32 : i32, i32, i32
  }
  func.func @transform_1(%arg0: i32, %arg1: i32, %arg2: i32) -> (i32, i32) {
    %c0_i32 = arith.constant 0 : i32
    %c0_i32_0 = arith.constant 0 : i32
    %c0_i32_1 = arith.constant 0 : i32
    return %c0_i32, %c0_i32_0 : i32, i32
  }
  func.func @transform_2(%arg0: i32, %arg1: i32, %arg2: i32) -> (i32, i32) {
    %c0_i32 = arith.constant 0 : i32
    %c0_i32_0 = arith.constant 0 : i32
    return %arg1, %c0_i32 : i32, i32
  }
  func.func @transform_3(%arg0: i32, %arg1: i32, %arg2: i32) -> (i32, i32) {
    %c0_i32 = arith.constant 0 : i32
    %c0_i32_0 = arith.constant 0 : i32
    return %arg1, %c0_i32 : i32, i32
  }
  func.func @transform_4(%arg0: i32, %arg1: i32, %arg2: i32) -> (i32, i32) {
    %c0_i32 = arith.constant 0 : i32
    %c0_i32_0 = arith.constant 0 : i32
    return %c0_i32, %arg2 : i32, i32
  }
  func.func @transform_5(%arg0: i32, %arg1: i32, %arg2: i32) -> (i32, i32) {
    %c0_i32 = arith.constant 0 : i32
    %c0_i32_0 = arith.constant 0 : i32
    return %c0_i32, %arg2 : i32, i32
  }
  func.func @transform_6(%arg0: i32, %arg1: i32, %arg2: i32) -> (i32, i32) {
    %c0_i32 = arith.constant 0 : i32
    %c0_i32_0 = arith.constant 0 : i32
    return %c0_i32, %arg2 : i32, i32
  }
  func.func @transform_7(%arg0: i32, %arg1: i32, %arg2: i32) -> (i32, i32, i32) {
    %c0_i32 = arith.constant 0 : i32
    return %arg0, %arg1, %arg2 : i32, i32, i32
  }
  func.func @transform_8(%arg0: i32, %arg1: i32, %arg2: i32) -> (i32, i32, i32) {
    %c0_i32 = arith.constant 0 : i32
    return %arg0, %arg1, %arg2 : i32, i32, i32
  }
  func.func @transform_9(%arg0: i32, %arg1: i32, %arg2: i32) -> (i32, i32, i32) {
    %c0_i32 = arith.constant 0 : i32
    return %arg0, %arg1, %arg2 : i32, i32, i32
  }
}

</mosaic_0001>

<llo_original>
// kernel: tpu_custom_call.1
$region0: #{tpu_custom_call.1}
  #allocation0 [shape = 'u32[]', space=smem, size = 0x4, offset = 0x4, fixed_abs, tag = 'smem constant byte address 0x4 - core index']
  #allocation1 [shape = 'u32[144,128]{1,0:T(1,128)}', space=vmem, size = 0x12000, scoped, tag = 'internal scratch']
  %s0 = inlined_call_operand.vmem [shape: f32[2,8,32], index: 0, kind: input, shape index: {}]
  %s1 = inlined_call_operand.vmem [shape: f32[1,32], index: 1, kind: input, shape index: {}]
  %s2 = inlined_call_operand.vmem [shape: f32[8,8], index: 2, kind: input, shape index: {}]
  %s3 = inlined_call_operand.vmem [shape: f32[8,8], index: 3, kind: input, shape index: {}]
  %s4 = inlined_call_operand.vmem [shape: f32[32,32], index: 4, kind: input, shape index: {}]
  %s5 = inlined_call_operand.vmem [shape: f32[32,16], index: 5, kind: input, shape index: {}]
  %s6 = inlined_call_operand.vmem [shape: f32[32,16], index: 6, kind: input, shape index: {}]
  %s7 = inlined_call_operand.hbm [shape: f32[2,8,32], index: 7, kind: output, shape index: {0}]
  %s8 = inlined_call_operand.hbm [shape: f32[2,8,16], index: 8, kind: output, shape index: {1}]
  %s9 = inlined_call_operand.hbm [shape: f32[2,8,16], index: 9, kind: output, shape index: {2}]
  %10 = xla_tuple %s7, %s8, %s9
  %s11 = sld [smem:[#allocation0]]
  $region77: #{tpu_custom_call.1} parent=0
    _
  %s13 = ssub.s32 1, %s11
  %s14 = scalar_select 0, %s13, %s11
  $region1: #{tpu_custom_call.1} parent=0
    #allocation2 [shape = 'u8[8192]{0}', space=vmem, size = 0x2000, scoped, tag = 'output window, operand 0']
    #allocation3 [shape = 's32[2]{0}', space=sflag, size = 0x8, scoped, tag = 'scoped memory for tpu_custom_call.1']
    #allocation4 [shape = 'u8[8192]{0}', space=vmem, size = 0x2000, scoped, tag = 'output window, operand 1']
    #allocation5 [shape = 's32[2]{0}', space=sflag, size = 0x8, scoped, tag = 'scoped memory for tpu_custom_call.1']
    #allocation6 [shape = 'u8[8192]{0}', space=vmem, size = 0x2000, scoped, tag = 'output window, operand 2']
    %15 = vsyncpa [#allocation3], 0
    %s16 = scalar_lea.sflag [#allocation3], 1
    %17 = vsyncpa %s16, 0
    %18 = vsyncpa [#allocation5], 0
    %s19 = scalar_lea.sflag [#allocation5], 1
    %20 = vsyncpa %s19, 0
    loop: start=0, step=1, limit=4
    $region2: #{tpu_custom_call.1} parent=1 // loop_pre_header
      _
    $region3: #{tpu_custom_call.1} parent=1 // loop_header
      %s22 = sphi 0, %s26
      %p23 = scmp.ge.s32.totalorder %s22, 4
      %s29 = sphi 0, %s48
      %s30 = sphi 0, %s44
      %s31 = sphi 0, %s40
      %s32 = sphi 0, %s29
      %s33 = sphi 0, %s30
      %s34 = sphi 0, %s31
      %s35 = sphi 0, %s32
      %s36 = sphi 0, %s33
      %s37 = sphi 0, %s34
      %s53 = sphi 0, %s55
      %s56 = sphi 0, %s53
      %s57 = sphi 0, %s56
      %s73 = sphi 0, %s57
      %s77 = sphi 0, %s77
      %s79 = sphi 0, %s77
      %s80 = sphi 0, %s79
      %s94 = sphi 0, %s80
      %s100 = sphi 0, %s102
      %s103 = sphi 0, %s100
      %s104 = sphi 0, %s103
      %s120 = sphi 0, %s104
      %s126 = sphi 0, %s128
      %s129 = sphi 0, %s126
      %s130 = sphi 0, %s129
      %s146 = sphi 0, %s130
      %s152 = sphi 0, %s154
      %s155 = sphi 0, %s152
      %s156 = sphi 0, %s155
      %s172 = sphi 0, %s156
      %s178 = sphi 0, %s180
      %s181 = sphi 0, %s178
      %s182 = sphi 0, %s181
      %s198 = sphi 0, %s182
      %s204 = sphi 0, %s206
      %s207 = sphi 0, %s204
      %s208 = sphi 0, %s207
      %s224 = sphi 0, %s208
      %s234 = sphi 0, %s236
      %s237 = sphi 0, %s234
      %s238 = sphi 0, %s237
      %s254 = sphi 0, %s238
      %s264 = sphi 0, %s266
      %s267 = sphi 0, %s264
      %s268 = sphi 0, %s267
      %s284 = sphi 0, %s268
      %s294 = sphi 0, %s296
      %s297 = sphi 0, %s294
      %s298 = sphi 0, %s297
      %s314 = sphi 0, %s298
    $region4: #{tpu_custom_call.1} parent=1 // loop_header_branch
      %25 = sbr.rel (%p23) target = $region8
    $region5: #{tpu_custom_call.1} parent=1 // loop_body
      %s27 = ssub.s32 %s22, 1
      %s28 = ssub.s32 %s22, 2
      %s38 = sadd.s32 1, %s31
      %p39 = scmp.ge.s32.totalorder %s38, 1
      %s40 = scalar_select %p39, 0, %s38
      %s41 = sadd.s32 1, %s30
      %s42 = scalar_select %p39, %s41, %s30
      %p43 = scmp.ge.s32.totalorder %s42, 1
      %s44 = scalar_select %p43, 0, %s42
      %s45 = sadd.s32 1, %s29
      %s46 = scalar_select %p43, %s45, %s29
      %p47 = scmp.ge.s32.totalorder %s46, 2
      %s48 = scalar_select %p47, 0, %s46
      %s49 = ssub.s32 %s29, %s48
      %s50 = ssub.s32 %s30, %s44
      %s51 = sor.u32 %s49, %s50
      %p52 = scmp.eq.s32.totalorder %s51, 0
      %s54 = sadd.s32 %s53, 1
      %s55 = scalar_select %p52, %s53, %s54
      %p58 = pneg %p52
      %p59 = scmp.eq.s32.totalorder %s22, 1
      %p60 = por %p58, %p59
      %p61 = scmp.ne.s32.totalorder %s53, %s56
      %p62 = scmp.eq.s32.totalorder %s22, 0
      %p63 = por %p61, %p62
      %p64 = scmp.ne.s32.totalorder %s53, %s56
      %p65 = scmp.eq.s32.totalorder %s27, 1
      %p66 = por %p64, %p65
      %p67 = scmp.ne.s32.totalorder %s56, %s57
      %p68 = scmp.eq.s32.totalorder %s27, 0
      %p69 = por %p67, %p68
      %p70 = scmp.ne.s32.totalorder %s56, %s57
      %p71 = scmp.eq.s32.totalorder %s28, 1
      %p72 = por %p70, %p71
      %p74 = scmp.ne.s32.totalorder %s57, %s73
      %p75 = scmp.eq.s32.totalorder %s28, 0
      %p76 = por %p74, %p75
      %s78 = sadd.s32 %s77, 1
      %p81 = scmp.eq.s32.totalorder %s22, 1
      %p82 = scmp.ne.s32.totalorder %s77, %s79
      %p83 = scmp.eq.s32.totalorder %s22, 0
      %p84 = por %p82, %p83
      %p85 = scmp.ne.s32.totalorder %s77, %s79
      %p86 = scmp.eq.s32.totalorder %s27, 1
      %p87 = por %p85, %p86
      %p88 = scmp.ne.s32.totalorder %s79, %s80
      %p89 = scmp.eq.s32.totalorder %s27, 0
      %p90 = por %p88, %p89
      %p91 = scmp.ne.s32.totalorder %s79, %s80
      %p92 = scmp.eq.s32.totalorder %s28, 1
      %p93 = por %p91, %p92
      %p95 = scmp.ne.s32.totalorder %s80, %s94
      %p96 = scmp.eq.s32.totalorder %s28, 0
      %p97 = por %p95, %p96
      %s98 = ssub.s32 %s30, %s44
      %p99 = scmp.eq.s32.totalorder %s98, 0
      %s101 = sadd.s32 %s100, 1
      %s102 = scalar_select %p99, %s100, %s101
      %p105 = pneg %p99
      %p106 = scmp.eq.s32.totalorder %s22, 1
      %p107 = por %p105, %p106
      %p108 = scmp.ne.s32.totalorder %s100, %s103
      %p109 = scmp.eq.s32.totalorder %s22, 0
      %p110 = por %p108, %p109
      %p111 = scmp.ne.s32.totalorder %s100, %s103
      %p112 = scmp.eq.s32.totalorder %s27, 1
      %p113 = por %p111, %p112
      %p114 = scmp.ne.s32.totalorder %s103, %s104
      %p115 = scmp.eq.s32.totalorder %s27, 0
      %p116 = por %p114, %p115
      %p117 = scmp.ne.s32.totalorder %s103, %s104
      %p118 = scmp.eq.s32.totalorder %s28, 1
      %p119 = por %p117, %p118
      %p121 = scmp.ne.s32.totalorder %s104, %s120
      %p122 = scmp.eq.s32.totalorder %s28, 0
      %p123 = por %p121, %p122
      %s124 = ssub.s32 %s30, %s44
      %p125 = scmp.eq.s32.totalorder %s124, 0
      %s127 = sadd.s32 %s126, 1
      %s128 = scalar_select %p125, %s126, %s127
      %p131 = pneg %p125
      %p132 = scmp.eq.s32.totalorder %s22, 1
      %p133 = por %p131, %p132
      %p134 = scmp.ne.s32.totalorder %s126, %s129
      %p135 = scmp.eq.s32.totalorder %s22, 0
      %p136 = por %p134, %p135
      %p137 = scmp.ne.s32.totalorder %s126, %s129
      %p138 = scmp.eq.s32.totalorder %s27, 1
      %p139 = por %p137, %p138
      %p140 = scmp.ne.s32.totalorder %s129, %s130
      %p141 = scmp.eq.s32.totalorder %s27, 0
      %p142 = por %p140, %p141
      %p143 = scmp.ne.s32.totalorder %s129, %s130
      %p144 = scmp.eq.s32.totalorder %s28, 1
      %p145 = por %p143, %p144
      %p147 = scmp.ne.s32.totalorder %s130, %s146
      %p148 = scmp.eq.s32.totalorder %s28, 0
      %p149 = por %p147, %p148
      %s150 = ssub.s32 %s31, %s40
      %p151 = scmp.eq.s32.totalorder %s150, 0
      %s153 = sadd.s32 %s152, 1
      %s154 = scalar_select %p151, %s152, %s153
      %p157 = pneg %p151
      %p158 = scmp.eq.s32.totalorder %s22, 1
      %p159 = por %p157, %p158
      %p160 = scmp.ne.s32.totalorder %s152, %s155
      %p161 = scmp.eq.s32.totalorder %s22, 0
      %p162 = por %p160, %p161
      %p163 = scmp.ne.s32.totalorder %s152, %s155
      %p164 = scmp.eq.s32.totalorder %s27, 1
      %p165 = por %p163, %p164
      %p166 = scmp.ne.s32.totalorder %s155, %s156
      %p167 = scmp.eq.s32.totalorder %s27, 0
      %p168 = por %p166, %p167
      %p169 = scmp.ne.s32.totalorder %s155, %s156
      %p170 = scmp.eq.s32.totalorder %s28, 1
      %p171 = por %p169, %p170
      %p173 = scmp.ne.s32.totalorder %s156, %s172
      %p174 = scmp.eq.s32.totalorder %s28, 0
      %p175 = por %p173, %p174
      %s176 = ssub.s32 %s31, %s40
      %p177 = scmp.eq.s32.totalorder %s176, 0
      %s179 = sadd.s32 %s178, 1
      %s180 = scalar_select %p177, %s178, %s179
      %p183 = pneg %p177
      %p184 = scmp.eq.s32.totalorder %s22, 1
      %p185 = por %p183, %p184
      %p186 = scmp.ne.s32.totalorder %s178, %s181
      %p187 = scmp.eq.s32.totalorder %s22, 0
      %p188 = por %p186, %p187
      %p189 = scmp.ne.s32.totalorder %s178, %s181
      %p190 = scmp.eq.s32.totalorder %s27, 1
      %p191 = por %p189, %p190
      %p192 = scmp.ne.s32.totalorder %s181, %s182
      %p193 = scmp.eq.s32.totalorder %s27, 0
      %p194 = por %p192, %p193
      %p195 = scmp.ne.s32.totalorder %s181, %s182
      %p196 = scmp.eq.s32.totalorder %s28, 1
      %p197 = por %p195, %p196
      %p199 = scmp.ne.s32.totalorder %s182, %s198
      %p200 = scmp.eq.s32.totalorder %s28, 0
      %p201 = por %p199, %p200
      %s202 = ssub.s32 %s31, %s40
      %p203 = scmp.eq.s32.totalorder %s202, 0
      %s205 = sadd.s32 %s204, 1
      %s206 = scalar_select %p203, %s204, %s205
      %p209 = pneg %p203
      %p210 = scmp.eq.s32.totalorder %s22, 1
      %p211 = por %p209, %p210
      %p212 = scmp.ne.s32.totalorder %s204, %s207
      %p213 = scmp.eq.s32.totalorder %s22, 0
      %p214 = por %p212, %p213
      %p215 = scmp.ne.s32.totalorder %s204, %s207
      %p216 = scmp.eq.s32.totalorder %s27, 1
      %p217 = por %p215, %p216
      %p218 = scmp.ne.s32.totalorder %s207, %s208
      %p219 = scmp.eq.s32.totalorder %s27, 0
      %p220 = por %p218, %p219
      %p221 = scmp.ne.s32.totalorder %s207, %s208
      %p222 = scmp.eq.s32.totalorder %s28, 1
      %p223 = por %p221, %p222
      %p225 = scmp.ne.s32.totalorder %s208, %s224
      %p226 = scmp.eq.s32.totalorder %s28, 0
      %p227 = por %p225, %p226
      %s228 = ssub.s32 %s29, %s48
      %s229 = ssub.s32 %s30, %s44
      %s230 = sor.u32 %s228, %s229
      %s231 = ssub.s32 %s31, %s40
      %s232 = sor.u32 %s230, %s231
      %p233 = scmp.eq.s32.totalorder %s232, 0
      %s235 = sadd.s32 %s234, 1
      %s236 = scalar_select %p233, %s234, %s235
      %p239 = pneg %p233
      %p240 = scmp.eq.s32.totalorder %s22, 1
      %p241 = por %p239, %p240
      %p242 = scmp.ne.s32.totalorder %s234, %s237
      %p243 = scmp.eq.s32.totalorder %s22, 0
      %p244 = por %p242, %p243
      %p245 = scmp.ne.s32.totalorder %s234, %s237
      %p246 = scmp.eq.s32.totalorder %s27, 1
      %p247 = por %p245, %p246
      %p248 = scmp.ne.s32.totalorder %s237, %s238
      %p249 = scmp.eq.s32.totalorder %s27, 0
      %p250 = por %p248, %p249
      %p251 = scmp.ne.s32.totalorder %s237, %s238
      %p252 = scmp.eq.s32.totalorder %s28, 1
      %p253 = por %p251, %p252
      %p255 = scmp.ne.s32.totalorder %s238, %s254
      %p256 = scmp.eq.s32.totalorder %s28, 0
      %p257 = por %p255, %p256
      %s258 = ssub.s32 %s29, %s48
      %s259 = ssub.s32 %s30, %s44
      %s260 = sor.u32 %s258, %s259
      %s261 = ssub.s32 %s31, %s40
      %s262 = sor.u32 %s260, %s261
      %p263 = scmp.eq.s32.totalorder %s262, 0
      %s265 = sadd.s32 %s264, 1
      %s266 = scalar_select %p263, %s264, %s265
      %p269 = pneg %p263
      %p270 = scmp.eq.s32.totalorder %s22, 1
      %p271 = por %p269, %p270
      %p272 = scmp.ne.s32.totalorder %s264, %s267
      %p273 = scmp.eq.s32.totalorder %s22, 0
      %p274 = por %p272, %p273
      %p275 = scmp.ne.s32.totalorder %s264, %s267
      %p276 = scmp.eq.s32.totalorder %s27, 1
      %p277 = por %p275, %p276
      %p278 = scmp.ne.s32.totalorder %s267, %s268
      %p279 = scmp.eq.s32.totalorder %s27, 0
      %p280 = por %p278, %p279
      %p281 = scmp.ne.s32.totalorder %s267, %s268
      %p282 = scmp.eq.s32.totalorder %s28, 1
      %p283 = por %p281, %p282
      %p285 = scmp.ne.s32.totalorder %s268, %s284
      %p286 = scmp.eq.s32.totalorder %s28, 0
      %p287 = por %p285, %p286
      %s288 = ssub.s32 %s29, %s48
      %s289 = ssub.s32 %s30, %s44
      %s290 = sor.u32 %s288, %s289
      %s291 = ssub.s32 %s31, %s40
      %s292 = sor.u32 %s290, %s291
      %p293 = scmp.eq.s32.totalorder %s292, 0
      %s295 = sadd.s32 %s294, 1
      %s296 = scalar_select %p293, %s294, %s295
      %p299 = pneg %p293
      %p300 = scmp.eq.s32.totalorder %s22, 1
      %p301 = por %p299, %p300
      %p302 = scmp.ne.s32.totalorder %s294, %s297
      %p303 = scmp.eq.s32.totalorder %s22, 0
      %p304 = por %p302, %p303
      %p305 = scmp.ne.s32.totalorder %s294, %s297
      %p306 = scmp.eq.s32.totalorder %s27, 1
      %p307 = por %p305, %p306
      %p308 = scmp.ne.s32.totalorder %s297, %s298
      %p309 = scmp.eq.s32.totalorder %s27, 0
      %p310 = por %p308, %p309
      %p311 = scmp.ne.s32.totalorder %s297, %s298
      %p312 = scmp.eq.s32.totalorder %s28, 1
      %p313 = por %p311, %p312
      %p315 = scmp.ne.s32.totalorder %s298, %s314
      %p316 = scmp.eq.s32.totalorder %s28, 0
      %p317 = por %p315, %p316
      %p318 = scmp.le.s32.totalorder 1, %s22
      %p319 = scmp.lt.s32.totalorder %s22, 3
      %p320 = pnand %p318, %p319
      %p321 = pneg %p320
      // Predicated region
      $region9: #{tpu_custom_call.1} parent=5 // pred_check
        _
      $region10: #{tpu_custom_call.1} parent=5 // pred_check_branch
        %323 = sbr.rel (%p320) target = $region12
      $region11: #{tpu_custom_call.1} parent=5 // pred_region
        %s324 = ssub.s32 %s22, 1
        // Predicated region
        $region13: #{tpu_custom_call.1} parent=11 // pred_check
          %p325 = pneg %p90
        $region14: #{tpu_custom_call.1} parent=11 // pred_check_branch
          %327 = sbr.rel (%p325) target = $region16
        $region15: #{tpu_custom_call.1} parent=11 // pred_region
          _
        $region16: #{tpu_custom_call.1} parent=11 // pred_fallthru
          _
        // Predicated region
        $region17: #{tpu_custom_call.1} parent=11 // pred_check
          %p328 = pneg %p116
        $region18: #{tpu_custom_call.1} parent=11 // pred_check_branch
          %330 = sbr.rel (%p328) target = $region20
        $region19: #{tpu_custom_call.1} parent=11 // pred_region
          %p331 = scmp.lt.s32.totalorder %s33, 0
          %s332 = scalar_select %p331, %s33, 0
          %s333 = smul.addr %s332, 8
          %s334 = scalar_lea.vmem %s2, %s333
        $region20: #{tpu_custom_call.1} parent=11 // pred_fallthru
          _
        // Predicated region
        $region21: #{tpu_custom_call.1} parent=11 // pred_check
          %p335 = pneg %p142
        $region22: #{tpu_custom_call.1} parent=11 // pred_check_branch
          %337 = sbr.rel (%p335) target = $region24
        $region23: #{tpu_custom_call.1} parent=11 // pred_region
          %p338 = scmp.lt.s32.totalorder %s33, 0
          %s339 = scalar_select %p338, %s33, 0
          %s340 = smul.addr %s339, 8
          %s341 = scalar_lea.vmem %s3, %s340
        $region24: #{tpu_custom_call.1} parent=11 // pred_fallthru
          _
        // Predicated region
        $region25: #{tpu_custom_call.1} parent=11 // pred_check
          %p342 = pneg %p168
        $region26: #{tpu_custom_call.1} parent=11 // pred_check_branch
          %344 = sbr.rel (%p342) target = $region28
        $region27: #{tpu_custom_call.1} parent=11 // pred_region
          %p345 = scmp.lt.s32.totalorder %s34, 0
          %s346 = scalar_select %p345, %s34, 0
          %s347 = smul.addr %s346, 8
          %s348 = scalar_lea.vmem %s4, %s347
        $region28: #{tpu_custom_call.1} parent=11 // pred_fallthru
          _
        // Predicated region
        $region29: #{tpu_custom_call.1} parent=11 // pred_check
          %p349 = pneg %p194
        $region30: #{tpu_custom_call.1} parent=11 // pred_check_branch
          %351 = sbr.rel (%p349) target = $region32
        $region31: #{tpu_custom_call.1} parent=11 // pred_region
          %p352 = scmp.lt.s32.totalorder %s34, 0
          %s353 = scalar_select %p352, %s34, 0
          %s354 = smul.addr %s353, 8
          %s355 = scalar_lea.vmem %s5, %s354
        $region32: #{tpu_custom_call.1} parent=11 // pred_fallthru
          _
        // Predicated region
        $region33: #{tpu_custom_call.1} parent=11 // pred_check
          %p356 = pneg %p220
        $region34: #{tpu_custom_call.1} parent=11 // pred_check_branch
          %358 = sbr.rel (%p356) target = $region36
        $region35: #{tpu_custom_call.1} parent=11 // pred_region
          %p359 = scmp.lt.s32.totalorder %s34, 0
          %s360 = scalar_select %p359, %s34, 0
          %s361 = smul.addr %s360, 8
          %s362 = scalar_lea.vmem %s6, %s361
        $region36: #{tpu_custom_call.1} parent=11 // pred_fallthru
          _
      $region12: #{tpu_custom_call.1} parent=5 // pred_fallthru
        _
      %p363 = scmp.lt.s32.totalorder %s22, 2
      // Predicated region
      $region37: #{tpu_custom_call.1} parent=5 // pred_check
        %p364 = pneg %p363
      $region38: #{tpu_custom_call.1} parent=5 // pred_check_branch
        %366 = sbr.rel (%p364) target = $region40
      $region39: #{tpu_custom_call.1} parent=5 // pred_region
        // Predicated region
        $region41: #{tpu_custom_call.1} parent=39 // pred_check
          %p367 = pneg %p63
        $region42: #{tpu_custom_call.1} parent=39 // pred_check_branch
          %369 = sbr.rel (%p367) target = $region44
        $region43: #{tpu_custom_call.1} parent=39 // pred_region
          %p370 = scmp.lt.s32.totalorder %s29, 1
          %s371 = scalar_select %p370, %s29, 1
          %p372 = scmp.lt.s32.totalorder %s30, 0
          %s373 = scalar_select %p372, %s30, 0
          %s374 = sadd.s32 %s373, %s371
          %s375 = smul.addr %s374, 8
          %s376 = scalar_lea.vmem %s0, %s375
        $region44: #{tpu_custom_call.1} parent=39 // pred_fallthru
          _
      $region40: #{tpu_custom_call.1} parent=5 // pred_fallthru
        _
      %p377 = scmp.le.s32.totalorder 1, %s22
      %p378 = scmp.lt.s32.totalorder %s22, 3
      %p379 = pnand %p377, %p378
      %p380 = pneg %p379
      // Predicated region
      $region45: #{tpu_custom_call.1} parent=5 // pred_check
        _
      $region46: #{tpu_custom_call.1} parent=5 // pred_check_branch
        %382 = sbr.rel (%p379) target = $region48
      $region47: #{tpu_custom_call.1} parent=5 // pred_region
        %s383 = ssub.s32 %s22, 1
        %p384 = scmp.lt.s32.totalorder %s32, 1
        %s385 = scalar_select %p384, %s32, 1
        %p386 = scmp.lt.s32.totalorder %s33, 0
        %s387 = scalar_select %p386, %s33, 0
        %s388 = sadd.s32 %s387, %s385
        %s389 = smul.addr %s388, 8
        %s390 = scalar_lea.vmem %s0, %s389
        %p391 = pneg %p69
        %p392 = pneg %p66
        %p393 = pneg %p90
        %p394 = pneg %p87
        %p395 = scmp.lt.s32.totalorder %s33, 0
        %s396 = scalar_select %p395, %s33, 0
        %s397 = smul.addr %s396, 8
        %s398 = scalar_lea.vmem %s2, %s397
        %p399 = pneg %p116
        %p400 = pneg %p113
        %p401 = scmp.lt.s32.totalorder %s33, 0
        %s402 = scalar_select %p401, %s33, 0
        %s403 = smul.addr %s402, 8
        %s404 = scalar_lea.vmem %s3, %s403
        %p405 = pneg %p142
        %p406 = pneg %p139
        %p407 = scmp.lt.s32.totalorder %s34, 0
        %s408 = scalar_select %p407, %s34, 0
        %s409 = smul.addr %s408, 8
        %s410 = scalar_lea.vmem %s4, %s409
        %p411 = pneg %p168
        %p412 = pneg %p165
        %p413 = scmp.lt.s32.totalorder %s34, 0
        %s414 = scalar_select %p413, %s34, 0
        %s415 = smul.addr %s414, 8
        %s416 = scalar_lea.vmem %s5, %s415
        %p417 = pneg %p194
        %p418 = pneg %p191
        %p419 = scmp.lt.s32.totalorder %s34, 0
        %s420 = scalar_select %p419, %s34, 0
        %s421 = smul.addr %s420, 8
        %s422 = scalar_lea.vmem %s6, %s421
        %p423 = pneg %p220
        %p424 = pneg %p217
        %p425 = pneg %p250
        %p426 = pneg %p247
        %s427 = sand.u32 %s237, 1
        %s428 = scalar_lea.sflag [#allocation3], %s427
        %s429 = sand.u32 %s237, 1
        %s430 = smul.addr %s429, 8
        %s431 = scalar_lea.vmem [#allocation2], %s430
        %p432 = pneg %p280
        %p433 = pneg %p277
        %s434 = sand.u32 %s27, 1
        %s435 = scalar_lea.sflag [#allocation5], %s434
        %s436 = sand.u32 %s267, 1
        %s437 = smul.addr %s436, 8
        %s438 = scalar_lea.vmem [#allocation4], %s437
        %p439 = pneg %p310
        %p440 = pneg %p307
        %s441 = sand.u32 %s27, 1
        %s442 = scalar_lea.sflag [#allocation5], %s441
        %s443 = sand.u32 %s297, 1
        %s444 = smul.addr %s443, 8
        %s445 = scalar_lea.vmem [#allocation6], %s444
        %p446 = scmp.lt.s32.totalorder %s32, 1
        %s447 = scalar_select %p446, %s32, 1
        %p448 = scmp.lt.s32.totalorder %s33, 0
        %s449 = scalar_select %p448, %s33, 0
        %s450 = sadd.s32 %s449, %s447
        %s451 = smul.addr %s450, 8
        %s452 = scalar_lea.vmem %s0, %s451
        %p453 = scmp.lt.s32.totalorder %s33, 0
        %s454 = scalar_select %p453, %s33, 0
        %s455 = smul.addr %s454, 8
        %s456 = scalar_lea.vmem %s2, %s455
        %p457 = scmp.lt.s32.totalorder %s33, 0
        %s458 = scalar_select %p457, %s33, 0
        %s459 = smul.addr %s458, 8
        %s460 = scalar_lea.vmem %s3, %s459
        %p461 = scmp.lt.s32.totalorder %s34, 0
        %s462 = scalar_select %p461, %s34, 0
        %s463 = smul.addr %s462, 8
        %s464 = scalar_lea.vmem %s4, %s463
        %p465 = scmp.lt.s32.totalorder %s34, 0
        %s466 = scalar_select %p465, %s34, 0
        %s467 = smul.addr %s466, 8
        %s468 = scalar_lea.vmem %s5, %s467
        %p469 = scmp.lt.s32.totalorder %s34, 0
        %s470 = scalar_select %p469, %s34, 0
        %s471 = smul.addr %s470, 8
        %s472 = scalar_lea.vmem %s6, %s471
        %v473 = vld [vmem:[%s452] sm:$0xff]
        %v474 = vmul.f32 %v473, %v473
        %vm475 = vcmask 261120
        %v476 = vsel %vm475, %v474, 0.0
        %477 = vadd.xlane.f32.xlu0 %v476
        %v478 = vpop.xlane.xlu0 %477
        %v479 = vrcp.pop 32.0
        %v480 = vmul.f32 %v478, %v479
        %v481 = vadd.f32 %v480, 1e-06
        %v482 = vrsqrt.pop %v481
        %v483 = vmul.f32 %v473, %v482
        %v484 = vld [vmem:[%s1] sm:$0x1]
        %v486 = vlaneseq
        %v487 = vshrl.u32 %v486, 7
        %v488 = vsub.s32 0, %v487
        %v489 = vrot.slane %v484, %v488
        %v491 = vmul.f32 %v483, %v489
        %v492 = vld [vmem:[%s464] sm:$0xff]
        %v493 = vld [vmem:[%s464 + $0x8] sm:$0xff]
        %v494 = vld [vmem:[%s464 + $0x10] sm:$0xff]
        %v495 = vld [vmem:[%s464 + $0x18] sm:$0xff]
        %v497 = vsel %vm475, %v491, 0
        %499 = vmatprep.subr.mxu0 0.0
        %500 = vmatpush1.msra.mxu0 %v492
        %501 = vmatprep.subr.mxu0 0.0
        %502 = vmatpush1.msra.mxu0 %v493
        %503 = vmatprep.subr.mxu0 0.0
        %504 = vmatpush1.msra.mxu0 %v494
        %505 = vmatprep.subr.mxu0 0.0
        %506 = vmatpush1.msra.mxu0 %v495
        %507 = vmatprep.subr.mxu0 0.0
        %508 = vmatpush1.msra.mxu0 0.0
        %509 = vmatprep.subr.mxu0 0.0
        %510 = vmatpush1.msra.mxu0 0.0
        %511 = vmatprep.subr.mxu0 0.0
        %512 = vmatpush1.msra.mxu0 0.0
        %513 = vmatprep.subr.mxu0 0.0
        %514 = vmatpush1.msra.mxu0 0.0
        %515 = vmatprep.subr.mxu0 0.0
        %516 = vmatpush1.msra.mxu0 0.0
        %517 = vmatprep.subr.mxu0 0.0
        %518 = vmatpush1.msra.mxu0 0.0
        %519 = vmatprep.subr.mxu0 0.0
        %520 = vmatpush1.msra.mxu0 0.0
        %521 = vmatprep.subr.mxu0 0.0
        %522 = vmatpush1.msra.mxu0 0.0
        %523 = vmatprep.subr.mxu0 0.0
        %524 = vmatpush1.msra.mxu0 0.0
        %525 = vmatprep.subr.mxu0 0.0
        %526 = vmatpush1.msra.mxu0 0.0
        %527 = vmatprep.subr.mxu0 0.0
        %528 = vmatpush1.msra.mxu0 0.0
        %529 = vmatprep.subr.mxu0 0.0
        %530 = vmatpush1.msra.mxu0 0.0
        %531 = vmatprep.subr.mxu0 0.0
        %532 = vmatpush1.msra.mxu0 0.0
        %533 = vmatprep.subr.mxu0 0.0
        %534 = vmatpush1.msra.mxu0 0.0
        %535 = vmatprep.subr.mxu0 0.0
        %536 = vmatpush1.msra.mxu0 0.0
        %537 = vmatprep.subr.mxu0 0.0
        %538 = vmatpush1.msra.mxu0 0.0
        %539 = vmatprep.subr.mxu0 0.0
        %540 = vmatpush1.msra.mxu0 0.0
        %541 = vmatprep.subr.mxu0 0.0
        %542 = vmatpush1.msra.mxu0 0.0
        %543 = vmatprep.subr.mxu0 0.0
        %544 = vmatpush1.msra.mxu0 0.0
        %545 = vmatprep.subr.mxu0 0.0
        %546 = vmatpush1.msra.mxu0 0.0
        %547 = vmatprep.subr.mxu0 0.0
        %548 = vmatpush1.msra.mxu0 0.0
        %549 = vmatprep.subr.mxu0 0.0
        %550 = vmatpush1.msra.mxu0 0.0
        %551 = vmatprep.subr.mxu0 0.0
        %552 = vmatpush1.msra.mxu0 0.0
        %553 = vmatprep.subr.mxu0 0.0
        %554 = vmatpush1.msra.mxu0 0.0
        %555 = vmatprep.subr.mxu0 0.0
        %556 = vmatpush1.msra.mxu0 0.0
        %557 = vmatprep.subr.mxu0 0.0
        %558 = vmatpush1.msra.mxu0 0.0
        %559 = vmatprep.subr.mxu0 0.0
        %560 = vmatpush1.msra.mxu0 0.0
        %561 = vmatprep.subr.mxu0 0.0
        %562 = vmatpush1.msra.mxu0 0.0
        %563 = vmatprep.mubr.f32.mxu0 0.0
        %564 = vmatmul.mubr.f32.gmra.mrb[0].mxu0 %v497
        %v565 = vpop.f32.mrb[0].mxu0
        %v566 = vadd.f32 0.0, %v565
        %v567 = vpop.f32.mrb[0].mxu0
        %568 = vdwg.mxu0
        %v569 = vld [vmem:[%s468] sm:$0xff]
        %v570 = vld [vmem:[%s468 + $0x8] sm:$0xff]
        %v571 = vld [vmem:[%s468 + $0x10] sm:$0xff]
        %v572 = vld [vmem:[%s468 + $0x18] sm:$0xff]
        %573 = vmatprep.subr.mxu0 0.0
        %574 = vmatpush1.msra.mxu0 %v569
        %575 = vmatprep.subr.mxu0 0.0
        %576 = vmatpush1.msra.mxu0 %v570
        %577 = vmatprep.subr.mxu0 0.0
        %578 = vmatpush1.msra.mxu0 %v571
        %579 = vmatprep.subr.mxu0 0.0
        %580 = vmatpush1.msra.mxu0 %v572
        %581 = vmatprep.subr.mxu0 0.0
        %582 = vmatpush1.msra.mxu0 0.0
        %583 = vmatprep.subr.mxu0 0.0
        %584 = vmatpush1.msra.mxu0 0.0
        %585 = vmatprep.subr.mxu0 0.0
        %586 = vmatpush1.msra.mxu0 0.0
        %587 = vmatprep.subr.mxu0 0.0
        %588 = vmatpush1.msra.mxu0 0.0
        %589 = vmatprep.subr.mxu0 0.0
        %590 = vmatpush1.msra.mxu0 0.0
        %591 = vmatprep.subr.mxu0 0.0
        %592 = vmatpush1.msra.mxu0 0.0
        %593 = vmatprep.subr.mxu0 0.0
        %594 = vmatpush1.msra.mxu0 0.0
        %595 = vmatprep.subr.mxu0 0.0
        %596 = vmatpush1.msra.mxu0 0.0
        %597 = vmatprep.subr.mxu0 0.0
        %598 = vmatpush1.msra.mxu0 0.0
        %599 = vmatprep.subr.mxu0 0.0
        %600 = vmatpush1.msra.mxu0 0.0
        %601 = vmatprep.subr.mxu0 0.0
        %602 = vmatpush1.msra.mxu0 0.0
        %603 = vmatprep.subr.mxu0 0.0
        %604 = vmatpush1.msra.mxu0 0.0
        %605 = vmatprep.subr.mxu0 0.0
        %606 = vmatpush1.msra.mxu0 0.0
        %607 = vmatprep.subr.mxu0 0.0
        %608 = vmatpush1.msra.mxu0 0.0
        %609 = vmatprep.subr.mxu0 0.0
        %610 = vmatpush1.msra.mxu0 0.0
        %611 = vmatprep.subr.mxu0 0.0
        %612 = vmatpush1.msra.mxu0 0.0
        %613 = vmatprep.subr.mxu0 0.0
        %614 = vmatpush1.msra.mxu0 0.0
        %615 = vmatprep.subr.mxu0 0.0
        %616 = vmatpush1.msra.mxu0 0.0
        %617 = vmatprep.subr.mxu0 0.0
        %618 = vmatpush1.msra.mxu0 0.0
        %619 = vmatprep.subr.mxu0 0.0
        %620 = vmatpush1.msra.mxu0 0.0
        %621 = vmatprep.subr.mxu0 0.0
        %622 = vmatpush1.msra.mxu0 0.0
        %623 = vmatprep.subr.mxu0 0.0
        %624 = vmatpush1.msra.mxu0 0.0
        %625 = vmatprep.subr.mxu0 0.0
        %626 = vmatpush1.msra.mxu0 0.0
        %627 = vmatprep.subr.mxu0 0.0
        %628 = vmatpush1.msra.mxu0 0.0
        %629 = vmatprep.subr.mxu0 0.0
        %630 = vmatpush1.msra.mxu0 0.0
        %631 = vmatprep.subr.mxu0 0.0
        %632 = vmatpush1.msra.mxu0 0.0
        %633 = vmatprep.subr.mxu0 0.0
        %634 = vmatpush1.msra.mxu0 0.0
        %635 = vmatprep.subr.mxu0 0.0
        %636 = vmatpush1.msra.mxu0 0.0
        %637 = vmatprep.mubr.f32.mxu0 0.0
        %638 = vmatmul.mubr.f32.gmra.mrb[0].mxu0 %v497
        %v639 = vpop.f32.mrb[0].mxu0
        %v640 = vadd.f32 0.0, %v639
        %v641 = vpop.f32.mrb[0].mxu0
        %642 = vdwg.mxu0
        %v643 = vld [vmem:[%s472] sm:$0xff]
        %v644 = vld [vmem:[%s472 + $0x8] sm:$0xff]
        %v645 = vld [vmem:[%s472 + $0x10] sm:$0xff]
        %v646 = vld [vmem:[%s472 + $0x18] sm:$0xff]
        %647 = vmatprep.subr.mxu0 0.0
        %648 = vmatpush1.msra.mxu0 %v643
        %649 = vmatprep.subr.mxu0 0.0
        %650 = vmatpush1.msra.mxu0 %v644
        %651 = vmatprep.subr.mxu0 0.0
        %652 = vmatpush1.msra.mxu0 %v645
        %653 = vmatprep.subr.mxu0 0.0
        %654 = vmatpush1.msra.mxu0 %v646
        %655 = vmatprep.subr.mxu0 0.0
        %656 = vmatpush1.msra.mxu0 0.0
        %657 = vmatprep.subr.mxu0 0.0
        %658 = vmatpush1.msra.mxu0 0.0
        %659 = vmatprep.subr.mxu0 0.0
        %660 = vmatpush1.msra.mxu0 0.0
        %661 = vmatprep.subr.mxu0 0.0
        %662 = vmatpush1.msra.mxu0 0.0
        %663 = vmatprep.subr.mxu0 0.0
        %664 = vmatpush1.msra.mxu0 0.0
        %665 = vmatprep.subr.mxu0 0.0
        %666 = vmatpush1.msra.mxu0 0.0
        %667 = vmatprep.subr.mxu0 0.0
        %668 = vmatpush1.msra.mxu0 0.0
        %669 = vmatprep.subr.mxu0 0.0
        %670 = vmatpush1.msra.mxu0 0.0
        %671 = vmatprep.subr.mxu0 0.0
        %672 = vmatpush1.msra.mxu0 0.0
        %673 = vmatprep.subr.mxu0 0.0
        %674 = vmatpush1.msra.mxu0 0.0
        %675 = vmatprep.subr.mxu0 0.0
        %676 = vmatpush1.msra.mxu0 0.0
        %677 = vmatprep.subr.mxu0 0.0
        %678 = vmatpush1.msra.mxu0 0.0
        %679 = vmatprep.subr.mxu0 0.0
        %680 = vmatpush1.msra.mxu0 0.0
        %681 = vmatprep.subr.mxu0 0.0
        %682 = vmatpush1.msra.mxu0 0.0
        %683 = vmatprep.subr.mxu0 0.0
        %684 = vmatpush1.msra.mxu0 0.0
        %685 = vmatprep.subr.mxu0 0.0
        %686 = vmatpush1.msra.mxu0 0.0
        %687 = vmatprep.subr.mxu0 0.0
        %688 = vmatpush1.msra.mxu0 0.0
        %689 = vmatprep.subr.mxu0 0.0
        %690 = vmatpush1.msra.mxu0 0.0
        %691 = vmatprep.subr.mxu0 0.0
        %692 = vmatpush1.msra.mxu0 0.0
        %693 = vmatprep.subr.mxu0 0.0
        %694 = vmatpush1.msra.mxu0 0.0
        %695 = vmatprep.subr.mxu0 0.0
        %696 = vmatpush1.msra.mxu0 0.0
        %697 = vmatprep.subr.mxu0 0.0
        %698 = vmatpush1.msra.mxu0 0.0
        %699 = vmatprep.subr.mxu0 0.0
        %700 = vmatpush1.msra.mxu0 0.0
        %701 = vmatprep.subr.mxu0 0.0
        %702 = vmatpush1.msra.mxu0 0.0
        %703 = vmatprep.subr.mxu0 0.0
        %704 = vmatpush1.msra.mxu0 0.0
        %705 = vmatprep.subr.mxu0 0.0
        %706 = vmatpush1.msra.mxu0 0.0
        %707 = vmatprep.subr.mxu0 0.0
        %708 = vmatpush1.msra.mxu0 0.0
        %709 = vmatprep.subr.mxu0 0.0
        %710 = vmatpush1.msra.mxu0 0.0
        %711 = vmatprep.mubr.f32.mxu0 0.0
        %712 = vmatmul.mubr.f32.gmra.mrb[0].mxu0 %v497
        %v713 = vpop.f32.mrb[0].mxu0
        %v714 = vadd.f32 0.0, %v713
        %v715 = vpop.f32.mrb[0].mxu0
        %716 = vdwg.mxu0
        %v717 = vld [vmem:[%s456] sm:$0xff]
        %v718 = vld [vmem:[%s460] sm:$0xff]
        %v719 = vsub.f32 0.0, %v566
        %721 = vrot.lane.b32.xlu0 %v719, 124
        %v722 = vpop.permute.xlu0 %721
        %725 = vrot.lane.b32.xlu0 %v566, 4
        %v726 = vpop.permute.xlu0 %725
        %vm728 = vcmask 31744
        %v729 = vsel %vm728, %v722, %v726
        %v730 = vmul.f32 %v566, %v717
        %v731 = vmul.f32 %v729, %v718
        %v732 = vadd.f32 %v730, %v731
        %733 = vrot.lane.b32.xlu0 %v719, 116
        %v734 = vpop.permute.xlu0 %733
        %736 = vrot.lane.b32.xlu0 %v566, 124
        %v737 = vpop.permute.xlu0 %736
        %v739 = vsel %vm728, %v734, %v737
        %741 = vrot.lane.b32.xlu0 %v717, 8
        %v742 = vpop.permute.xlu0 %741
        %v744 = vmul.f32 %v566, %v742
        %v745 = vmul.f32 %v739, %v718
        %747 = vrot.lane.b32.xlu0 %v745, 8
        %v748 = vpop.permute.xlu0 %747
        %v750 = vadd.f32 %v744, %v748
        %751 = vrot.lane.b32.xlu0 %v719, 108
        %v752 = vpop.permute.xlu0 %751
        %754 = vrot.lane.b32.xlu0 %v566, 116
        %v755 = vpop.permute.xlu0 %754
        %v757 = vsel %vm728, %v752, %v755
        %758 = vrot.lane.b32.xlu0 %v717, 16
        %v759 = vpop.permute.xlu0 %758
        %v761 = vmul.f32 %v566, %v759
        %v762 = vmul.f32 %v757, %v718
        %764 = vrot.lane.b32.xlu0 %v762, 16
        %v765 = vpop.permute.xlu0 %764
        %v767 = vadd.f32 %v761, %v765
        %768 = vrot.lane.b32.xlu0 %v719, 100
        %v769 = vpop.permute.xlu0 %768
        %771 = vrot.lane.b32.xlu0 %v566, 108
        %v772 = vpop.permute.xlu0 %771
        %v774 = vsel %vm728, %v769, %v772
        %775 = vrot.lane.b32.xlu0 %v717, 24
        %v776 = vpop.permute.xlu0 %775
        %v778 = vmul.f32 %v566, %v776
        %v779 = vmul.f32 %v774, %v718
        %781 = vrot.lane.b32.xlu0 %v779, 24
        %v782 = vpop.permute.xlu0 %781
        %v784 = vadd.f32 %v778, %v782
        %vm785 = vcmask 64512
        %v786 = vsel %vm785, %v732, %v750
        %vm787 = vcmask 130048
        %v788 = vsel %vm787, %v786, %v767
        %vm789 = vcmask 195584
        %v790 = vsel %vm789, %v788, %v784
        %791 = vst.msk [vmem:[%s431] sm:$0xff] %vm475, %v790
        %v792 = vsub.f32 0.0, %v640
        %794 = vrot.lane.b32.xlu0 %v792, 124
        %v795 = vpop.permute.xlu0 %794
        %798 = vrot.lane.b32.xlu0 %v640, 4
        %v799 = vpop.permute.xlu0 %798
        %v801 = vsel %vm728, %v795, %v799
        %v802 = vmul.f32 %v640, %v717
        %v803 = vmul.f32 %v801, %v718
        %v804 = vadd.f32 %v802, %v803
        %805 = vrot.lane.b32.xlu0 %v792, 116
        %v806 = vpop.permute.xlu0 %805
        %808 = vrot.lane.b32.xlu0 %v640, 124
        %v809 = vpop.permute.xlu0 %808
        %v811 = vsel %vm728, %v806, %v809
        %v812 = vmul.f32 %v640, %v742
        %v813 = vmul.f32 %v811, %v718
        %815 = vrot.lane.b32.xlu0 %v813, 8
        %v816 = vpop.permute.xlu0 %815
        %v818 = vadd.f32 %v812, %v816
        %v819 = vsel %vm785, %v804, %v818
        %820 = vst.msk [vmem:[%s438] sm:$0xff] %vm787, %v819
        %821 = vst.msk [vmem:[%s445] sm:$0xff] %vm787, %v714
        %s822 = sand.u32 %s237, 1
        %s823 = scalar_lea.sflag [#allocation3], %s822
        %s824 = sand.u32 %s237, 1
        %s825 = smul.addr %s824, 8
        %s826 = scalar_lea.vmem [#allocation2], %s825
        %s827 = sand.u32 %s27, 1
        %s828 = scalar_lea.sflag [#allocation5], %s827
        %s829 = sand.u32 %s267, 1
        %s830 = smul.addr %s829, 8
        %s831 = scalar_lea.vmem [#allocation4], %s830
        %s832 = sand.u32 %s27, 1
        %s833 = scalar_lea.sflag [#allocation5], %s832
        %s834 = sand.u32 %s297, 1
        %s835 = smul.addr %s834, 8
        %s836 = scalar_lea.vmem [#allocation6], %s835
        // Predicated region
        $region49: #{tpu_custom_call.1} parent=47 // pred_check
          %p837 = pneg %p247
        $region50: #{tpu_custom_call.1} parent=47 // pred_check_branch
          %839 = sbr.rel (%p837) target = $region52
        $region51: #{tpu_custom_call.1} parent=47 // pred_region
          %s841 = ssub.s32 128, 128
          %842 = vsyncadd %s823, %s841
          %s843 = sadd.s32 %s34, %s33
          %s844 = sadd.s32 %s843, %s32
          %s845 = smul.addr %s844, 128
          %s846 = scalar_lea.hbm %s7, %s845
          %s848 = sshll.u32 %s826, 4
          %s849 = int_to_ptr.vmem [resolvable:$true] %s848
          %851 = dma.vmem_to_hbm [thread:$0]  %s849, 128, %s846, %s823
        $region52: #{tpu_custom_call.1} parent=47 // pred_fallthru
          _
        // Predicated region
        $region53: #{tpu_custom_call.1} parent=47 // pred_check
          %p852 = pneg %p277
        $region54: #{tpu_custom_call.1} parent=47 // pred_check_branch
          %854 = sbr.rel (%p852) target = $region56
        $region55: #{tpu_custom_call.1} parent=47 // pred_region
          %s856 = ssub.s32 128, 128
          %857 = vsyncadd %s828, %s856
          %s858 = sadd.s32 %s34, %s33
          %s859 = sadd.s32 %s858, %s32
          %s860 = smul.addr %s859, 128
          %s861 = scalar_lea.hbm %s8, %s860
          %s863 = sshll.u32 %s831, 4
          %s864 = int_to_ptr.vmem [resolvable:$true] %s863
          %866 = dma.vmem_to_hbm [thread:$0]  %s864, 128, %s861, %s828
        $region56: #{tpu_custom_call.1} parent=47 // pred_fallthru
          _
        // Predicated region
        $region57: #{tpu_custom_call.1} parent=47 // pred_check
          %p867 = pneg %p307
        $region58: #{tpu_custom_call.1} parent=47 // pred_check_branch
          %869 = sbr.rel (%p867) target = $region60
        $region59: #{tpu_custom_call.1} parent=47 // pred_region
          %s871 = ssub.s32 128, 128
          %872 = vsyncadd %s833, %s871
          %s873 = sadd.s32 %s34, %s33
          %s874 = sadd.s32 %s873, %s32
          %s875 = smul.addr %s874, 128
          %s876 = scalar_lea.hbm %s9, %s875
          %s878 = sshll.u32 %s836, 4
          %s879 = int_to_ptr.vmem [resolvable:$true] %s878
          %881 = dma.vmem_to_hbm [thread:$0]  %s879, 128, %s876, %s833
        $region60: #{tpu_custom_call.1} parent=47 // pred_fallthru
          _
      $region48: #{tpu_custom_call.1} parent=5 // pred_fallthru
        _
      %p882 = scmp.le.s32.totalorder 2, %s22
      // Predicated region
      $region61: #{tpu_custom_call.1} parent=5 // pred_check
        %p883 = pneg %p882
      $region62: #{tpu_custom_call.1} parent=5 // pred_check_branch
        %885 = sbr.rel (%p883) target = $region64
      $region63: #{tpu_custom_call.1} parent=5 // pred_region
        %s886 = ssub.s32 %s22, 2
        // Predicated region
        $region65: #{tpu_custom_call.1} parent=63 // pred_check
          %p887 = pneg %p253
        $region66: #{tpu_custom_call.1} parent=63 // pred_check_branch
          %889 = sbr.rel (%p887) target = $region68
        $region67: #{tpu_custom_call.1} parent=63 // pred_region
          %s890 = sand.u32 %s238, 1
          %s891 = scalar_lea.sflag [#allocation3], %s890
          %s892 = sand.u32 %s238, 1
          %s893 = smul.addr %s892, 8
          %s894 = scalar_lea.vmem [#allocation2], %s893
          %895 = dma.done %s891, 128
        $region68: #{tpu_custom_call.1} parent=63 // pred_fallthru
          _
        // Predicated region
        $region69: #{tpu_custom_call.1} parent=63 // pred_check
          %p896 = pneg %p283
        $region70: #{tpu_custom_call.1} parent=63 // pred_check_branch
          %898 = sbr.rel (%p896) target = $region72
        $region71: #{tpu_custom_call.1} parent=63 // pred_region
          %s899 = sand.u32 %s28, 1
          %s900 = scalar_lea.sflag [#allocation5], %s899
          %s901 = sand.u32 %s268, 1
          %s902 = smul.addr %s901, 8
          %s903 = scalar_lea.vmem [#allocation4], %s902
          %904 = dma.done %s900, 128
        $region72: #{tpu_custom_call.1} parent=63 // pred_fallthru
          _
        // Predicated region
        $region73: #{tpu_custom_call.1} parent=63 // pred_check
          %p905 = pneg %p313
        $region74: #{tpu_custom_call.1} parent=63 // pred_check_branch
          %907 = sbr.rel (%p905) target = $region76
        $region75: #{tpu_custom_call.1} parent=63 // pred_region
          %s908 = sand.u32 %s28, 1
          %s909 = scalar_lea.sflag [#allocation5], %s908
          %s910 = sand.u32 %s298, 1
          %s911 = smul.addr %s910, 8
          %s912 = scalar_lea.vmem [#allocation6], %s911
          %913 = dma.done %s909, 128
        $region76: #{tpu_custom_call.1} parent=63 // pred_fallthru
          _
      $region64: #{tpu_custom_call.1} parent=5 // pred_fallthru
        _
    $region6: #{tpu_custom_call.1} parent=1 // loop_footer
      %s26 = sadd.s32 1, %s22
    $region7: #{tpu_custom_call.1} parent=1 // loop_footer_branch
      %21 = sbr.rel target = $region3
    $region8: #{tpu_custom_call.1} parent=1 // loop_exit
      _
    %914 = vsyncpa [#allocation3], 1
    %s915 = scalar_lea.sflag [#allocation3], 1
    %916 = vsyncpa %s915, 1
    %917 = vsyncpa [#allocation5], 1
    %s918 = scalar_lea.sflag [#allocation5], 1
    %919 = vsyncpa %s918, 1

</llo_original>
